<compile_context>
chip_gen: v7x
topology: tpu7x:2x2x1
jax: 0.10.0
libtpu: 0.0.40
codegen_flags: <defaults>
</compile_context>

<pallas_src>
import jax
import jax.numpy as jnp
from jax.experimental import pallas as pl
from jax.experimental.pallas import tpu as pltpu

B, S, V, H = 2, 8, 128, 768  # pairs, seq, vocab, hidden (768 fixed by fc = Linear(768*2, 1))


def _encode_tile(ids, mask, emb_wp, bp):
    """Stand-in encoder for one sentence tile: one-hot-matmul embedding lookup +
    masked mean pool + pooler (dense + tanh), with embedding and pooler dense
    pre-fused offline into emb_wp (exact: the stand-in is linear between them)."""
    bt = ids.shape[0]
    iota_v = jax.lax.broadcasted_iota(jnp.int32, (bt, S, V), 2)
    ind = (iota_v == ids[:, :, None]).astype(jnp.float32)             # (bt, S, V)
    wc = jnp.sum(ind * mask[:, :, None], axis=1)                      # (bt, V) masked token counts
    denom = jnp.maximum(jnp.sum(mask, axis=1, keepdims=True), 1.0)    # (bt, 1)
    wc = wc * pl.reciprocal(denom, approx=True)                       # fold 1/denom pre-matmul (EUP)
    h = jnp.dot(wc.astype(jnp.bfloat16), emb_wp,
                preferred_element_type=jnp.float32) + bp              # (bt, H), f32 accumulate
    return jnp.tanh(h)                                                # f32 elementwise (v5e-safe)


def siamese_kernel(ids1_ref, mask1_ref, ids2_ref, mask2_ref,
                   emb_wp_ref, bp_ref, wfc_ref, bfc_ref, out_ref):
    emb_wp = emb_wp_ref[...]
    bp = bp_ref[...]

    p1 = _encode_tile(ids1_ref[...], mask1_ref[...], emb_wp, bp)   # == drop(out1[1])
    p2 = _encode_tile(ids2_ref[...], mask2_ref[...], emb_wp, bp)   # == drop(out2[1])

    # fc(cat([p1, p2], dim=1)) as a VPU multiply + XLU lane reduction (no padded N=1 MXU matmul).
    w1 = wfc_ref[0:1, :]                                           # (1, H) weights for p1 half
    w2 = wfc_ref[1:2, :]                                           # (1, H) weights for p2 half
    logits = jnp.sum(p1 * w1 + p2 * w2, axis=-1, keepdims=True) + bfc_ref[...]   # (bt, 1)
    out_ref[...] = jax.nn.sigmoid(logits)


@jax.jit
def siamese_forward(ids1, mask1, ids2, mask2, prepared):
    """ids*: (B, S) int32, mask*: (B, S) float32, prepared: output of prepare_params()."""
    emb_wp, bp, wfc2, bfc = prepared
    nb, seq = ids1.shape

    # Pair-batch grid: single tile for small batches, 8-row (sublane-aligned) tiles otherwise.
    if nb <= 8:
        b_tile, nb_pad = nb, nb
    else:
        b_tile = 8
        nb_pad = ((nb + 7) // 8) * 8
    if nb_pad != nb:
        pad = ((0, nb_pad - nb), (0, 0))
        ids1, ids2 = jnp.pad(ids1, pad), jnp.pad(ids2, pad)
        mask1, mask2 = jnp.pad(mask1, pad), jnp.pad(mask2, pad)

    tok_spec = pl.BlockSpec((b_tile, seq), lambda i: (i, 0))        # streamed per grid step
    const = lambda i: (0, 0)                                        # weights: VMEM-resident

    out = pl.pallas_call(
        siamese_kernel,
        out_shape=jax.ShapeDtypeStruct((nb_pad, 1), jnp.float32),
        grid_spec=pltpu.PrefetchScalarGridSpec(
            num_scalar_prefetch=0,
            grid=(nb_pad // b_tile,),
            in_specs=[
                tok_spec, tok_spec, tok_spec, tok_spec,
                pl.BlockSpec((V, H), const),     # emb_wp (bf16, pre-fused emb@wp)
                pl.BlockSpec((1, H), const),     # pooler bias
                pl.BlockSpec((2, H), const),     # fc weight as (2, H)
                pl.BlockSpec((1, 1), const),     # fc bias
            ],
            out_specs=pl.BlockSpec((b_tile, 1), lambda i: (i, 0)),
        ),
        compiler_params=pltpu.CompilerParams(
            dimension_semantics=("parallel",)),   # shard pair tiles across v7x TensorCores
    )(ids1, mask1, ids2, mask2, emb_wp, bp, wfc2, bfc)

    return out if nb_pad == nb else out[:nb]


def init_params(key):
    """Raw parameters with the PyTorch module's shapes (stand-in encoder + fc head)."""
    k_emb, k_wp, k_fc = jax.random.split(key, 3)
    emb = jax.random.normal(k_emb, (V, H), jnp.float32) * 0.02      # embedding table
    wp = jax.random.normal(k_wp, (H, H), jnp.float32) * 0.02        # pooler dense
    bp = jnp.zeros((1, H), jnp.float32)
    wfc = jax.random.normal(k_fc, (2 * H, 1), jnp.float32) * 0.02   # nn.Linear(768*2, 1)
    bfc = jnp.zeros((1, 1), jnp.float32)
    return emb, wp, bp, wfc, bfc


def prepare_params(params):
    """One-time offline prep (outside jit, outside the per-call path):
    fuse emb@wp (exact for the linear stand-in), cast to bf16, reshape fc weight to (2, H)."""
    emb, wp, bp, wfc, bfc = params
    emb_wp = jnp.dot(emb, wp, preferred_element_type=jnp.float32).astype(jnp.bfloat16)  # (V, H)
    return (emb_wp,
            bp.reshape(1, H).astype(jnp.float32),
            wfc.reshape(2, H).astype(jnp.float32),
            bfc.reshape(1, 1).astype(jnp.float32))


if __name__ == "__main__":
    key = jax.random.PRNGKey(0)
    k_ids1, k_ids2, k_params = jax.random.split(key, 3)

    ids1 = jax.random.randint(k_ids1, (B, S), 0, V, dtype=jnp.int32)
    ids2 = jax.random.randint(k_ids2, (B, S), 0, V, dtype=jnp.int32)
    mask1 = jnp.ones((B, S), jnp.float32).at[:, 6:].set(0.0)  # some padding
    mask2 = jnp.ones((B, S), jnp.float32).at[:, 5:].set(0.0)

    prepared = jax.device_put(prepare_params(init_params(k_params)))

    out = siamese_forward(ids1, mask1, ids2, mask2, prepared)
    out = jax.block_until_ready(out)

    assert out.shape == (B, 1), out.shape
    assert bool(jnp.all((out > 0.0) & (out < 1.0)))  # sigmoid range
    print("KERNEL_OK")
</pallas_src>

<mosaic_0001>
module attributes {stable_mosaic.version = 11 : i64} {
  func.func @siamese_kernel(%arg0: i32, %arg1: memref<2x8xi32, #tpu.memory_space<vmem>>, %arg2: memref<2x8xf32, #tpu.memory_space<vmem>>, %arg3: memref<2x8xi32, #tpu.memory_space<vmem>>, %arg4: memref<2x8xf32, #tpu.memory_space<vmem>>, %arg5: memref<128x768xbf16, #tpu.memory_space<vmem>>, %arg6: memref<1x768xf32, #tpu.memory_space<vmem>>, %arg7: memref<2x768xf32, #tpu.memory_space<vmem>>, %arg8: memref<1x1xf32, #tpu.memory_space<vmem>>, %arg9: memref<2x1xf32, #tpu.memory_space<vmem>>) attributes {dimension_semantics = [#tpu.dimension_semantics<parallel>], iteration_bounds = array<i64: 1>, scalar_prefetch = 0 : i64, scratch_operands = 0 : i64, tpu.core_type = #tpu.core_type<tc>, window_params = [{transform_indices = @transform_0, window_bounds = array<i64: 2, 8>}, {transform_indices = @transform_1, window_bounds = array<i64: 2, 8>}, {transform_indices = @transform_2, window_bounds = array<i64: 2, 8>}, {transform_indices = @transform_3, window_bounds = array<i64: 2, 8>}, {pipeline_mode = #tpu.pipeline_mode<synchronous>, transform_indices = @transform_4, window_bounds = array<i64: 128, 768>}, {pipeline_mode = #tpu.pipeline_mode<synchronous>, transform_indices = @transform_5, window_bounds = array<i64: 1, 768>}, {pipeline_mode = #tpu.pipeline_mode<synchronous>, transform_indices = @transform_6, window_bounds = array<i64: 2, 768>}, {pipeline_mode = #tpu.pipeline_mode<synchronous>, transform_indices = @transform_7, window_bounds = array<i64: 1, 1>}, {transform_indices = @transform_8, window_bounds = array<i64: 2, 1>}]} {
    %c0 = arith.constant 0 : index
    %c0_0 = arith.constant 0 : index
    %0 = vector.load %arg5[%c0, %c0_0] : memref<128x768xbf16, #tpu.memory_space<vmem>>, vector<128x768xbf16>
    %c0_1 = arith.constant 0 : index
    %c0_2 = arith.constant 0 : index
    %1 = vector.load %arg6[%c0_1, %c0_2] : memref<1x768xf32, #tpu.memory_space<vmem>>, vector<1x768xf32>
    %c0_3 = arith.constant 0 : index
    %c0_4 = arith.constant 0 : index
    %2 = vector.load %arg1[%c0_3, %c0_4] : memref<2x8xi32, #tpu.memory_space<vmem>>, vector<2x8xi32>
    %c0_5 = arith.constant 0 : index
    %c0_6 = arith.constant 0 : index
    %3 = vector.load %arg2[%c0_5, %c0_6] : memref<2x8xf32, #tpu.memory_space<vmem>>, vector<2x8xf32>
    %4 = tpu.iota {dimensions = array<i32: 2>} : vector<2x8x128xi32>
    %5 = vector.shape_cast %2 : vector<2x8xi32> to vector<2x8x1xi32>
    %6 = vector.broadcast %5 : vector<2x8x1xi32> to vector<2x8x128xi32>
    %7 = arith.cmpi eq, %4, %6 : vector<2x8x128xi32>
    %8 = arith.extui %7 : vector<2x8x128xi1> to vector<2x8x128xi32>
    %9 = arith.sitofp %8 : vector<2x8x128xi32> to vector<2x8x128xf32>
    %10 = vector.shape_cast %3 : vector<2x8xf32> to vector<2x8x1xf32>
    %11 = vector.broadcast %10 : vector<2x8x1xf32> to vector<2x8x128xf32>
    %12 = arith.mulf %9, %11 : vector<2x8x128xf32>
    %cst = arith.constant dense<0.000000e+00> : vector<2x128xf32>
    %13 = vector.multi_reduction <add>, %12, %cst [1] : vector<2x8x128xf32> to vector<2x128xf32>
    %cst_7 = arith.constant dense<0.000000e+00> : vector<2xf32>
    %14 = vector.multi_reduction <add>, %3, %cst_7 [1] : vector<2x8xf32> to vector<2xf32>
    %15 = vector.shape_cast %14 : vector<2xf32> to vector<2x1xf32>
    %cst_8 = arith.constant 1.000000e+00 : f32
    %16 = vector.broadcast %cst_8 : f32 to vector<2x1xf32>
    %17 = arith.maximumf %15, %16 : vector<2x1xf32>
    %18 = tpu.reciprocal %17 {approx = true} : vector<2x1xf32> -> vector<2x1xf32>
    %19 = vector.broadcast %18 : vector<2x1xf32> to vector<2x128xf32>
    %20 = arith.mulf %13, %19 : vector<2x128xf32>
    %21 = arith.truncf %20 : vector<2x128xf32> to vector<2x128xbf16>
    %cst_9 = arith.constant dense<0.000000e+00> : vector<2x768xf32>
    %22 = tpu.matmul %21, %0, %cst_9 {dimension_numbers = #tpu.dot_dimension_numbers<[1], [0], [0], [1], [0, 0, 1, 1], [], []>} : vector<2x128xbf16>, vector<128x768xbf16>, vector<2x768xf32> -> vector<2x768xf32>
    %23 = vector.broadcast %1 : vector<1x768xf32> to vector<2x768xf32>
    %24 = arith.addf %22, %23 : vector<2x768xf32>
    %25 = math.tanh %24 : vector<2x768xf32>
    %c0_10 = arith.constant 0 : index
    %c0_11 = arith.constant 0 : index
    %26 = vector.load %arg3[%c0_10, %c0_11] : memref<2x8xi32, #tpu.memory_space<vmem>>, vector<2x8xi32>
    %c0_12 = arith.constant 0 : index
    %c0_13 = arith.constant 0 : index
    %27 = vector.load %arg4[%c0_12, %c0_13] : memref<2x8xf32, #tpu.memory_space<vmem>>, vector<2x8xf32>
    %28 = tpu.iota {dimensions = array<i32: 2>} : vector<2x8x128xi32>
    %29 = vector.shape_cast %26 : vector<2x8xi32> to vector<2x8x1xi32>
    %30 = vector.broadcast %29 : vector<2x8x1xi32> to vector<2x8x128xi32>
    %31 = arith.cmpi eq, %28, %30 : vector<2x8x128xi32>
    %32 = arith.extui %31 : vector<2x8x128xi1> to vector<2x8x128xi32>
    %33 = arith.sitofp %32 : vector<2x8x128xi32> to vector<2x8x128xf32>
    %34 = vector.shape_cast %27 : vector<2x8xf32> to vector<2x8x1xf32>
    %35 = vector.broadcast %34 : vector<2x8x1xf32> to vector<2x8x128xf32>
    %36 = arith.mulf %33, %35 : vector<2x8x128xf32>
    %cst_14 = arith.constant dense<0.000000e+00> : vector<2x128xf32>
    %37 = vector.multi_reduction <add>, %36, %cst_14 [1] : vector<2x8x128xf32> to vector<2x128xf32>
    %cst_15 = arith.constant dense<0.000000e+00> : vector<2xf32>
    %38 = vector.multi_reduction <add>, %27, %cst_15 [1] : vector<2x8xf32> to vector<2xf32>
    %39 = vector.shape_cast %38 : vector<2xf32> to vector<2x1xf32>
    %cst_16 = arith.constant 1.000000e+00 : f32
    %40 = vector.broadcast %cst_16 : f32 to vector<2x1xf32>
    %41 = arith.maximumf %39, %40 : vector<2x1xf32>
    %42 = tpu.reciprocal %41 {approx = true} : vector<2x1xf32> -> vector<2x1xf32>
    %43 = vector.broadcast %42 : vector<2x1xf32> to vector<2x128xf32>
    %44 = arith.mulf %37, %43 : vector<2x128xf32>
    %45 = arith.truncf %44 : vector<2x128xf32> to vector<2x128xbf16>
    %cst_17 = arith.constant dense<0.000000e+00> : vector<2x768xf32>
    %46 = tpu.matmul %45, %0, %cst_17 {dimension_numbers = #tpu.dot_dimension_numbers<[1], [0], [0], [1], [0, 0, 1, 1], [], []>} : vector<2x128xbf16>, vector<128x768xbf16>, vector<2x768xf32> -> vector<2x768xf32>
    %47 = vector.broadcast %1 : vector<1x768xf32> to vector<2x768xf32>
    %48 = arith.addf %46, %47 : vector<2x768xf32>
    %49 = math.tanh %48 : vector<2x768xf32>
    %c0_18 = arith.constant 0 : index
    %c0_19 = arith.constant 0 : index
    %50 = vector.load %arg7[%c0_18, %c0_19] : memref<2x768xf32, #tpu.memory_space<vmem>>, vector<1x768xf32>
    %c1 = arith.constant 1 : index
    %c0_20 = arith.constant 0 : index
    %51 = vector.load %arg7[%c1, %c0_20] : memref<2x768xf32, #tpu.memory_space<vmem>>, vector<1x768xf32>
    %52 = vector.broadcast %50 : vector<1x768xf32> to vector<2x768xf32>
    %53 = arith.mulf %25, %52 : vector<2x768xf32>
    %54 = vector.broadcast %51 : vector<1x768xf32> to vector<2x768xf32>
    %55 = arith.mulf %49, %54 : vector<2x768xf32>
    %56 = arith.addf %53, %55 : vector<2x768xf32>
    %cst_21 = arith.constant dense<0.000000e+00> : vector<2xf32>
    %57 = vector.multi_reduction <add>, %56, %cst_21 [1] : vector<2x768xf32> to vector<2xf32>
    %58 = vector.shape_cast %57 : vector<2xf32> to vector<2x1xf32>
    %c0_22 = arith.constant 0 : index
    %c0_23 = arith.constant 0 : index
    %59 = vector.load %arg8[%c0_22, %c0_23] : memref<1x1xf32, #tpu.memory_space<vmem>>, vector<1x1xf32>
    %60 = vector.broadcast %59 : vector<1x1xf32> to vector<2x1xf32>
    %61 = arith.addf %58, %60 : vector<2x1xf32>
    %62 = arith.negf %61 : vector<2x1xf32>
    %63 = math.exp %62 : vector<2x1xf32>
    %cst_24 = arith.constant 1.000000e+00 : f32
    %64 = vector.broadcast %cst_24 : f32 to vector<2x1xf32>
    %65 = arith.addf %64, %63 : vector<2x1xf32>
    %66 = arith.divf %64, %65 : vector<2x1xf32>
    %c0_25 = arith.constant 0 : index
    %c0_26 = arith.constant 0 : index
    %67 = vector.load %arg9[%c0_25, %c0_26] : memref<2x1xf32, #tpu.memory_space<vmem>>, vector<2x1xf32>
    tpu.vector_store %arg9[%c0_25, %c0_26], %66 {strides = array<i32>} : memref<2x1xf32, #tpu.memory_space<vmem>>, vector<2x1xf32>,
    return
  }
  func.func @transform_0(%arg0: i32) -> (i32, i32) {
    %c0_i32 = arith.constant 0 : i32
    %c0_i32_0 = arith.constant 0 : i32
    return %arg0, %c0_i32 : i32, i32
  }
  func.func @transform_1(%arg0: i32) -> (i32, i32) {
    %c0_i32 = arith.constant 0 : i32
    %c0_i32_0 = arith.constant 0 : i32
    return %arg0, %c0_i32 : i32, i32
  }
  func.func @transform_2(%arg0: i32) -> (i32, i32) {
    %c0_i32 = arith.constant 0 : i32
    %c0_i32_0 = arith.constant 0 : i32
    return %arg0, %c0_i32 : i32, i32
  }
  func.func @transform_3(%arg0: i32) -> (i32, i32) {
    %c0_i32 = arith.constant 0 : i32
    %c0_i32_0 = arith.constant 0 : i32
    return %arg0, %c0_i32 : i32, i32
  }
  func.func @transform_4(%arg0: i32) -> (i32, i32) {
    %c0_i32 = arith.constant 0 : i32
    %c0_i32_0 = arith.constant 0 : i32
    %c0_i32_1 = arith.constant 0 : i32
    return %c0_i32, %c0_i32_0 : i32, i32
  }
  func.func @transform_5(%arg0: i32) -> (i32, i32) {
    %c0_i32 = arith.constant 0 : i32
    %c0_i32_0 = arith.constant 0 : i32
    %c0_i32_1 = arith.constant 0 : i32
    return %c0_i32, %c0_i32_0 : i32, i32
  }
  func.func @transform_6(%arg0: i32) -> (i32, i32) {
    %c0_i32 = arith.constant 0 : i32
    %c0_i32_0 = arith.constant 0 : i32
    %c0_i32_1 = arith.constant 0 : i32
    return %c0_i32, %c0_i32_0 : i32, i32
  }
  func.func @transform_7(%arg0: i32) -> (i32, i32) {
    %c0_i32 = arith.constant 0 : i32
    %c0_i32_0 = arith.constant 0 : i32
    %c0_i32_1 = arith.constant 0 : i32
    return %c0_i32, %c0_i32_0 : i32, i32
  }
  func.func @transform_8(%arg0: i32) -> (i32, i32) {
    %c0_i32 = arith.constant 0 : i32
    %c0_i32_0 = arith.constant 0 : i32
    return %arg0, %c0_i32 : i32, i32
  }
}

</mosaic_0001>

<llo_original>
// kernel: siamese_forward.1
$region0: #{siamese_forward.1}
  #allocation0 [shape = 'u32[]', space=smem, size = 0x4, offset = 0x4, fixed_abs, tag = 'smem constant byte address 0x4 - core index']
  #allocation1 [shape = 'u32[144,128]{1,0:T(1,128)}', space=vmem, size = 0x12000, scoped, tag = 'internal scratch']
  #allocation2 [shape = 'f32[1,1]{1,0:T(1,128)S(1)}', space=vmem, size = 0x200, scoped, tag = 'scoped memory for siamese_forward.1']
  %s0 = inlined_call_operand.vmem [shape: s32[2,8], index: 0, kind: input, shape index: {}]
  %s1 = inlined_call_operand.vmem [shape: f32[2,8], index: 1, kind: input, shape index: {}]
  %s2 = inlined_call_operand.hbm [shape: s32[2,8], index: 2, kind: input, shape index: {}]
  %s3 = inlined_call_operand.hbm [shape: f32[2,8], index: 3, kind: input, shape index: {}]
  %s4 = inlined_call_operand.hbm [shape: bf16[128,768], index: 4, kind: input, shape index: {}]
  %s5 = inlined_call_operand.vmem [shape: f32[1,768], index: 5, kind: input, shape index: {}]
  %s6 = inlined_call_operand.vmem [shape: f32[2,768], index: 6, kind: input, shape index: {}]
  %s7 = inlined_call_operand.<no memory space> [shape: f32[1,1], index: 7, kind: input, shape index: {}]
  %s8 = inlined_call_operand.vmem [shape: f32[2,1], index: 8, kind: output, shape index: {}]
  %s9 = sld [smem:[#allocation0]]
  $region54: #{siamese_forward.1} parent=0
    _
  %s11 = ssub.s32 1, %s9
  %s12 = scalar_select 0, %s11, %s9
  %v13 = vstv %s7
  %14 = vst [vmem:[#allocation2] sm:$0x1] %v13
  $region1: #{siamese_forward.1} parent=0
    #allocation3 [shape = 'u8[1024]{0}', space=vmem, size = 0x400, scoped, tag = 'input window, operand 2, single buffered']
    #allocation4 [shape = 's32[1]{0}', space=sflag, size = 0x4, scoped, tag = 'scoped memory for siamese_forward.1']
    #allocation5 [shape = 'u8[1024]{0}', space=vmem, size = 0x400, scoped, tag = 'input window, operand 3, single buffered']
    #allocation6 [shape = 's32[1]{0}', space=sflag, size = 0x4, scoped, tag = 'scoped memory for siamese_forward.1']
    #allocation7 [shape = 'u8[196608]{0}', space=vmem, size = 0x30000, scoped, tag = 'input window, operand 4, single buffered']
    %15 = vsyncpa [#allocation4], 0
    %16 = vsyncpa [#allocation6], 0
    // Predicated region
    $region2: #{siamese_forward.1} parent=1 // pred_check
      _
    $region3: #{siamese_forward.1} parent=1 // pred_check_branch
      %18 = sbr.rel (0) target = $region5
    $region4: #{siamese_forward.1} parent=1 // pred_region
      _
    $region5: #{siamese_forward.1} parent=1 // pred_fallthru
      _
    // Predicated region
    $region6: #{siamese_forward.1} parent=1 // pred_check
      _
    $region7: #{siamese_forward.1} parent=1 // pred_check_branch
      %20 = sbr.rel (0) target = $region9
    $region8: #{siamese_forward.1} parent=1 // pred_region
      _
    $region9: #{siamese_forward.1} parent=1 // pred_fallthru
      _
    // Predicated region
    $region10: #{siamese_forward.1} parent=1 // pred_check
      _
    $region11: #{siamese_forward.1} parent=1 // pred_check_branch
      %22 = sbr.rel (0) target = $region13
    $region12: #{siamese_forward.1} parent=1 // pred_region
      %s24 = ssub.s32 32, 32
      %25 = vsyncadd [#allocation4], %s24
      %s27 = sshll.u32 [#allocation3], 4
      %s28 = int_to_ptr.vmem [resolvable:$true] %s27
      %30 = dma.hbm_to_vmem [thread:$0]  %s2, 32, %s28, [#allocation4]
    $region13: #{siamese_forward.1} parent=1 // pred_fallthru
      _
    // Predicated region
    $region14: #{siamese_forward.1} parent=1 // pred_check
      _
    $region15: #{siamese_forward.1} parent=1 // pred_check_branch
      %32 = sbr.rel (0) target = $region17
    $region16: #{siamese_forward.1} parent=1 // pred_region
      %s34 = ssub.s32 32, 32
      %35 = vsyncadd [#allocation6], %s34
      %s37 = sshll.u32 [#allocation5], 4
      %s38 = int_to_ptr.vmem [resolvable:$true] %s37
      %40 = dma.hbm_to_vmem [thread:$0]  %s3, 32, %s38, [#allocation6]
    $region17: #{siamese_forward.1} parent=1 // pred_fallthru
      _
    // Predicated region
    $region18: #{siamese_forward.1} parent=1 // pred_check
      _
    $region19: #{siamese_forward.1} parent=1 // pred_check_branch
      %42 = sbr.rel (0) target = $region21
    $region20: #{siamese_forward.1} parent=1 // pred_region
      %s44 = ssub.s32 6144, 6144
      %45 = vsyncadd [#allocation6], %s44
      %s46 = sshll.u32 [#allocation7], 4
      %s47 = int_to_ptr.vmem [resolvable:$true] %s46
      %52 = dma.hbm_to_vmem [thread:$0]  %s4, 6144, %s47, [#allocation6], 384, 384, 24
    $region21: #{siamese_forward.1} parent=1 // pred_fallthru
      _
    // Predicated region
    $region22: #{siamese_forward.1} parent=1 // pred_check
      _
    $region23: #{siamese_forward.1} parent=1 // pred_check_branch
      %54 = sbr.rel (0) target = $region25
    $region24: #{siamese_forward.1} parent=1 // pred_region
      _
    $region25: #{siamese_forward.1} parent=1 // pred_fallthru
      _
    // Predicated region
    $region26: #{siamese_forward.1} parent=1 // pred_check
      _
    $region27: #{siamese_forward.1} parent=1 // pred_check_branch
      %56 = sbr.rel (0) target = $region29
    $region28: #{siamese_forward.1} parent=1 // pred_region
      _
    $region29: #{siamese_forward.1} parent=1 // pred_fallthru
      _
    // Predicated region
    $region30: #{siamese_forward.1} parent=1 // pred_check
      _
    $region31: #{siamese_forward.1} parent=1 // pred_check_branch
      %58 = sbr.rel (0) target = $region33
    $region32: #{siamese_forward.1} parent=1 // pred_region
      _
    $region33: #{siamese_forward.1} parent=1 // pred_fallthru
      _
    // Predicated region
    $region34: #{siamese_forward.1} parent=1 // pred_check
      _
    $region35: #{siamese_forward.1} parent=1 // pred_check_branch
      %60 = sbr.rel (0) target = $region37
    $region36: #{siamese_forward.1} parent=1 // pred_region
      %61 = dma.done [#allocation4], 32
    $region37: #{siamese_forward.1} parent=1 // pred_fallthru
      _
    // Predicated region
    $region38: #{siamese_forward.1} parent=1 // pred_check
      _
    $region39: #{siamese_forward.1} parent=1 // pred_check_branch
      %63 = sbr.rel (0) target = $region41
    $region40: #{siamese_forward.1} parent=1 // pred_region
      %64 = dma.done [#allocation6], 32
    $region41: #{siamese_forward.1} parent=1 // pred_fallthru
      _
    // Predicated region
    $region42: #{siamese_forward.1} parent=1 // pred_check
      _
    $region43: #{siamese_forward.1} parent=1 // pred_check_branch
      %66 = sbr.rel (0) target = $region45
    $region44: #{siamese_forward.1} parent=1 // pred_region
      %67 = dma.done [#allocation6], 6144
    $region45: #{siamese_forward.1} parent=1 // pred_fallthru
      _
    %v69 = vld [vmem:[#allocation7] sm:$0xff]
    %v70 = vld [vmem:[#allocation7 + $0x8] sm:$0xff]
    %v71 = vld [vmem:[#allocation7 + $0x10] sm:$0xff]
    %v72 = vld [vmem:[#allocation7 + $0x18] sm:$0xff]
    %v73 = vld [vmem:[#allocation7 + $0x20] sm:$0xff]
    %v74 = vld [vmem:[#allocation7 + $0x28] sm:$0xff]
    %v75 = vld [vmem:[#allocation7 + $0x30] sm:$0xff]
    %v76 = vld [vmem:[#allocation7 + $0x38] sm:$0xff]
    %v77 = vld [vmem:[#allocation7 + $0x40] sm:$0xff]
    %v78 = vld [vmem:[#allocation7 + $0x48] sm:$0xff]
    %v79 = vld [vmem:[#allocation7 + $0x50] sm:$0xff]
    %v80 = vld [vmem:[#allocation7 + $0x58] sm:$0xff]
    %v81 = vld [vmem:[#allocation7 + $0x60] sm:$0xff]
    %v82 = vld [vmem:[#allocation7 + $0x68] sm:$0xff]
    %v83 = vld [vmem:[#allocation7 + $0x70] sm:$0xff]
    %v84 = vld [vmem:[#allocation7 + $0x78] sm:$0xff]
    %v85 = vld [vmem:[#allocation7 + $0x80] sm:$0xff]
    %v86 = vld [vmem:[#allocation7 + $0x88] sm:$0xff]
    %v87 = vld [vmem:[#allocation7 + $0x90] sm:$0xff]
    %v88 = vld [vmem:[#allocation7 + $0x98] sm:$0xff]
    %v89 = vld [vmem:[#allocation7 + $0xa0] sm:$0xff]
    %v90 = vld [vmem:[#allocation7 + $0xa8] sm:$0xff]
    %v91 = vld [vmem:[#allocation7 + $0xb0] sm:$0xff]
    %v92 = vld [vmem:[#allocation7 + $0xb8] sm:$0xff]
    %v93 = vld [vmem:[#allocation7 + $0xc0] sm:$0xff]
    %v94 = vld [vmem:[#allocation7 + $0xc8] sm:$0xff]
    %v95 = vld [vmem:[#allocation7 + $0xd0] sm:$0xff]
    %v96 = vld [vmem:[#allocation7 + $0xd8] sm:$0xff]
    %v97 = vld [vmem:[#allocation7 + $0xe0] sm:$0xff]
    %v98 = vld [vmem:[#allocation7 + $0xe8] sm:$0xff]
    %v99 = vld [vmem:[#allocation7 + $0xf0] sm:$0xff]
    %v100 = vld [vmem:[#allocation7 + $0xf8] sm:$0xff]
    %v101 = vld [vmem:[#allocation7 + $0x100] sm:$0xff]
    %v102 = vld [vmem:[#allocation7 + $0x108] sm:$0xff]
    %v103 = vld [vmem:[#allocation7 + $0x110] sm:$0xff]
    %v104 = vld [vmem:[#allocation7 + $0x118] sm:$0xff]
    %v105 = vld [vmem:[#allocation7 + $0x120] sm:$0xff]
    %v106 = vld [vmem:[#allocation7 + $0x128] sm:$0xff]
    %v107 = vld [vmem:[#allocation7 + $0x130] sm:$0xff]
    %v108 = vld [vmem:[#allocation7 + $0x138] sm:$0xff]
    %v109 = vld [vmem:[#allocation7 + $0x140] sm:$0xff]
    %v110 = vld [vmem:[#allocation7 + $0x148] sm:$0xff]
    %v111 = vld [vmem:[#allocation7 + $0x150] sm:$0xff]
    %v112 = vld [vmem:[#allocation7 + $0x158] sm:$0xff]
    %v113 = vld [vmem:[#allocation7 + $0x160] sm:$0xff]
    %v114 = vld [vmem:[#allocation7 + $0x168] sm:$0xff]
    %v115 = vld [vmem:[#allocation7 + $0x170] sm:$0xff]
    %v116 = vld [vmem:[#allocation7 + $0x178] sm:$0xff]
    %v117 = vld [vmem:[%s5] sm:$0x3f]
    %v118 = vld [vmem:[%s0] sm:$0x3]
    %v119 = vld [vmem:[%s1] sm:$0x3]
    %v120 = vlaneseq
    %v121 = vand.u32 %v120, 127
    %v122 = vlaneseq
    %v123 = vshrl.u32 %v122, 7
    %v124 = vsub.s32 0, %v123
    %v125 = vrot.slane %v118, %v124
    %127 = vbcast.lane.b32.xlu0 %v125, 256
    %v128 = vpop.permute.xlu0 %127
    %v129 = vlaneseq
    %v130 = vshrl.u32 %v129, 7
    %v131 = vsub.s32 1, %v130
    %v132 = vrot.slane %v118, %v131
    %134 = vbcast.lane.b32.xlu0 %v132, 256
    %v135 = vpop.permute.xlu0 %134
    %vm136 = vcmp.eq.s32.totalorder %v121, %v128
    %vm137 = vcmp.eq.s32.totalorder %v121, %v135
    %v138 = vsel %vm136, 1, 0
    %v139 = vsel %vm137, 1, 0
    %v140 = vcvt.s32.f32 %v138
    %v141 = vcvt.s32.f32 %v139
    %v142 = vlaneseq
    %v143 = vshrl.u32 %v142, 7
    %v144 = vsub.s32 0, %v143
    %v145 = vrot.slane %v119, %v144
    %147 = vbcast.lane.b32.xlu0 %v145, 256
    %v148 = vpop.permute.xlu0 %147
    %v149 = vlaneseq
    %v150 = vshrl.u32 %v149, 7
    %v151 = vsub.s32 1, %v150
    %v152 = vrot.slane %v119, %v151
    %154 = vbcast.lane.b32.xlu0 %v152, 256
    %v155 = vpop.permute.xlu0 %154
    %v156 = vmul.f32 %v140, %v148
    %v157 = vmul.f32 %v141, %v155
    %v158 = vrot.slane %v156, 4
    %v159 = vadd.f32 %v156, %v158
    %v160 = vrot.slane %v159, 2
    %v161 = vadd.f32 %v159, %v160
    %v162 = vrot.slane %v161, 1
    %v163 = vadd.f32 %v161, %v162
    %v164 = vrot.slane %v157, 4
    %v165 = vadd.f32 %v157, %v164
    %v166 = vrot.slane %v165, 2
    %v167 = vadd.f32 %v165, %v166
    %v168 = vrot.slane %v167, 1
    %v169 = vadd.f32 %v167, %v168
    %vm170 = vcmask 58368
    %v171 = vsel %vm170, %v119, 0.0
    %172 = vadd.xlane.f32.xlu0 %v171
    %v173 = vpop.xlane.xlu0 %172
    %v174 = vmax.f32 %v173, 1.0
    %v175 = vrcp.pop %v174
    %v177 = vrot.slane %v175, 1
    %v180 = vmul.f32 %v163, %v175
    %v181 = vmul.f32 %v169, %v177
    %v182 = vpack.c.bf16 %v180, %v180
    %v183 = vpack.c.bf16 %v181, %v181
    %v185 = vlaneseq
    %v186 = vshrl.u32 %v185, 7
    %v187 = vsub.s32 0, %v186
    %v188 = vrot.slane %v117, %v187
    %v189 = vlaneseq
    %v190 = vshrl.u32 %v189, 7
    %v191 = vsub.s32 1, %v190
    %v192 = vrot.slane %v117, %v191
    %v193 = vlaneseq
    %v194 = vshrl.u32 %v193, 7
    %v195 = vsub.s32 2, %v194
    %v196 = vrot.slane %v117, %v195
    %v197 = vlaneseq
    %v198 = vshrl.u32 %v197, 7
    %v199 = vsub.s32 3, %v198
    %v200 = vrot.slane %v117, %v199
    %v201 = vlaneseq
    %v202 = vshrl.u32 %v201, 7
    %v203 = vsub.s32 4, %v202
    %v204 = vrot.slane %v117, %v203
    %v205 = vlaneseq
    %v206 = vshrl.u32 %v205, 7
    %v207 = vsub.s32 5, %v206
    %v208 = vrot.slane %v117, %v207
    %v217 = vunpack.c.l.b16 %v182
    %v218 = vunpack.c.l.b16 %v183
    %v219 = vrot.slane %v218, 7
    %vm220 = vcmask 1041409
    %v221 = vsel %vm220, %v219, %v217
    %v222 = vpack.c.b16 %v221, %v221
    %v272 = vunpack.c.l.b16 %v69
    %v273 = vunpack.c.h.b16 %v69
    %v274 = vunpack.c.l.b16 %v70
    %v275 = vunpack.c.h.b16 %v70
    %v276 = vunpack.c.l.b16 %v71
    %v277 = vunpack.c.h.b16 %v71
    %v278 = vunpack.c.l.b16 %v72
    %v279 = vunpack.c.h.b16 %v72
    %v280 = vunpack.c.l.b16 %v73
    %v281 = vunpack.c.h.b16 %v73
    %v282 = vunpack.c.l.b16 %v74
    %v283 = vunpack.c.h.b16 %v74
    %v284 = vunpack.c.l.b16 %v75
    %v285 = vunpack.c.h.b16 %v75
    %v286 = vunpack.c.l.b16 %v76
    %v287 = vunpack.c.h.b16 %v76
    %v288 = vunpack.c.l.b16 %v77
    %v289 = vunpack.c.h.b16 %v77
    %v290 = vunpack.c.l.b16 %v78
    %v291 = vunpack.c.h.b16 %v78
    %v292 = vunpack.c.l.b16 %v79
    %v293 = vunpack.c.h.b16 %v79
    %v294 = vunpack.c.l.b16 %v80
    %v295 = vunpack.c.h.b16 %v80
    %v296 = vunpack.c.l.b16 %v81
    %v297 = vunpack.c.h.b16 %v81
    %v298 = vunpack.c.l.b16 %v82
    %v299 = vunpack.c.h.b16 %v82
    %v300 = vunpack.c.l.b16 %v83
    %v301 = vunpack.c.h.b16 %v83
    %v302 = vunpack.c.l.b16 %v84
    %v303 = vunpack.c.h.b16 %v84
    %v304 = vunpack.c.l.b16 %v85
    %v305 = vunpack.c.h.b16 %v85
    %v306 = vunpack.c.l.b16 %v86
    %v307 = vunpack.c.h.b16 %v86
    %v308 = vunpack.c.l.b16 %v87
    %v309 = vunpack.c.h.b16 %v87
    %v310 = vunpack.c.l.b16 %v88
    %v311 = vunpack.c.h.b16 %v88
    %v312 = vunpack.c.l.b16 %v89
    %v313 = vunpack.c.h.b16 %v89
    %v314 = vunpack.c.l.b16 %v90
    %v315 = vunpack.c.h.b16 %v90
    %v316 = vunpack.c.l.b16 %v91
    %v317 = vunpack.c.h.b16 %v91
    %v318 = vunpack.c.l.b16 %v92
    %v319 = vunpack.c.h.b16 %v92
    %v320 = vunpack.c.l.b16 %v93
    %v321 = vunpack.c.h.b16 %v93
    %v322 = vunpack.c.l.b16 %v94
    %v323 = vunpack.c.h.b16 %v94
    %v324 = vunpack.c.l.b16 %v95
    %v325 = vunpack.c.h.b16 %v95
    %v326 = vunpack.c.l.b16 %v96
    %v327 = vunpack.c.h.b16 %v96
    %v328 = vunpack.c.l.b16 %v97
    %v329 = vunpack.c.h.b16 %v97
    %v330 = vunpack.c.l.b16 %v98
    %v331 = vunpack.c.h.b16 %v98
    %v332 = vunpack.c.l.b16 %v99
    %v333 = vunpack.c.h.b16 %v99
    %v334 = vunpack.c.l.b16 %v100
    %v335 = vunpack.c.h.b16 %v100
    %v336 = vunpack.c.l.b16 %v101
    %v337 = vunpack.c.h.b16 %v101
    %v338 = vunpack.c.l.b16 %v102
    %v339 = vunpack.c.h.b16 %v102
    %v340 = vunpack.c.l.b16 %v103
    %v341 = vunpack.c.h.b16 %v103
    %v342 = vunpack.c.l.b16 %v104
    %v343 = vunpack.c.h.b16 %v104
    %v344 = vunpack.c.l.b16 %v105
    %v345 = vunpack.c.h.b16 %v105
    %v346 = vunpack.c.l.b16 %v106
    %v347 = vunpack.c.h.b16 %v106
    %v348 = vunpack.c.l.b16 %v107
    %v349 = vunpack.c.h.b16 %v107
    %v350 = vunpack.c.l.b16 %v108
    %v351 = vunpack.c.h.b16 %v108
    %v352 = vunpack.c.l.b16 %v109
    %v353 = vunpack.c.h.b16 %v109
    %v354 = vunpack.c.l.b16 %v110
    %v355 = vunpack.c.h.b16 %v110
    %v356 = vunpack.c.l.b16 %v111
    %v357 = vunpack.c.h.b16 %v111
    %v358 = vunpack.c.l.b16 %v112
    %v359 = vunpack.c.h.b16 %v112
    %v360 = vunpack.c.l.b16 %v113
    %v361 = vunpack.c.h.b16 %v113
    %v362 = vunpack.c.l.b16 %v114
    %v363 = vunpack.c.h.b16 %v114
    %v364 = vunpack.c.l.b16 %v115
    %v365 = vunpack.c.h.b16 %v115
    %v366 = vunpack.c.l.b16 %v116
    %v367 = vunpack.c.h.b16 %v116
    %v368 = vpack.c.b16 %v278, %v272
    %v369 = vpack.c.b16 %v279, %v273
    %v370 = vpack.c.b16 %v280, %v274
    %v371 = vpack.c.b16 %v281, %v275
    %v372 = vpack.c.b16 %v282, %v276
    %v373 = vpack.c.b16 %v283, %v277
    %v374 = vpack.c.b16 %v290, %v284
    %v375 = vpack.c.b16 %v291, %v285
    %v376 = vpack.c.b16 %v292, %v286
    %v377 = vpack.c.b16 %v293, %v287
    %v378 = vpack.c.b16 %v294, %v288
    %v379 = vpack.c.b16 %v295, %v289
    %v380 = vpack.c.b16 %v302, %v296
    %v381 = vpack.c.b16 %v303, %v297
    %v382 = vpack.c.b16 %v304, %v298
    %v383 = vpack.c.b16 %v305, %v299
    %v384 = vpack.c.b16 %v306, %v300
    %v385 = vpack.c.b16 %v307, %v301
    %v386 = vpack.c.b16 %v314, %v308
    %v387 = vpack.c.b16 %v315, %v309
    %v388 = vpack.c.b16 %v316, %v310
    %v389 = vpack.c.b16 %v317, %v311
    %v390 = vpack.c.b16 %v318, %v312
    %v391 = vpack.c.b16 %v319, %v313
    %v392 = vpack.c.b16 %v326, %v320
    %v393 = vpack.c.b16 %v327, %v321
    %v394 = vpack.c.b16 %v328, %v322
    %v395 = vpack.c.b16 %v329, %v323
    %v396 = vpack.c.b16 %v330, %v324
    %v397 = vpack.c.b16 %v331, %v325
    %v398 = vpack.c.b16 %v338, %v332
    %v399 = vpack.c.b16 %v339, %v333
    %v400 = vpack.c.b16 %v340, %v334
    %v401 = vpack.c.b16 %v341, %v335
    %v402 = vpack.c.b16 %v342, %v336
    %v403 = vpack.c.b16 %v343, %v337
    %v404 = vpack.c.b16 %v350, %v344
    %v405 = vpack.c.b16 %v351, %v345
    %v406 = vpack.c.b16 %v352, %v346
    %v407 = vpack.c.b16 %v353, %v347
    %v408 = vpack.c.b16 %v354, %v348
    %v409 = vpack.c.b16 %v355, %v349
    %v410 = vpack.c.b16 %v362, %v356
    %v411 = vpack.c.b16 %v363, %v357
    %v412 = vpack.c.b16 %v364, %v358
    %v413 = vpack.c.b16 %v365, %v359
    %v414 = vpack.c.b16 %v366, %v360
    %v415 = vpack.c.b16 %v367, %v361
    %464 = vmatprep.subr.bf16.mxu0 %v369
    %465 = vmatpush1.bf16.msra.mxu0 %v368
    %466 = vmatprep.subr.bf16.mxu0 %v375
    %467 = vmatpush1.bf16.msra.mxu0 %v374
    %468 = vmatprep.subr.bf16.mxu0 %v381
    %469 = vmatpush1.bf16.msra.mxu0 %v380
    %470 = vmatprep.subr.bf16.mxu0 %v387
    %471 = vmatpush1.bf16.msra.mxu0 %v386
    %472 = vmatprep.subr.bf16.mxu0 %v393
    %473 = vmatpush1.bf16.msra.mxu0 %v392
    %474 = vmatprep.subr.bf16.mxu0 %v399
    %475 = vmatpush1.bf16.msra.mxu0 %v398
    %476 = vmatprep.subr.bf16.mxu0 %v405
    %477 = vmatpush1.bf16.msra.mxu0 %v404
    %478 = vmatprep.subr.bf16.mxu0 %v411
    %479 = vmatpush1.bf16.msra.mxu0 %v410
    %480 = vmatprep.subr.bf16.mxu0 0
    %481 = vmatpush1.bf16.msra.mxu0 0
    %482 = vmatprep.subr.bf16.mxu0 0
    %483 = vmatpush1.bf16.msra.mxu0 0
    %484 = vmatprep.subr.bf16.mxu0 0
    %485 = vmatpush1.bf16.msra.mxu0 0
    %486 = vmatprep.subr.bf16.mxu0 0
    %487 = vmatpush1.bf16.msra.mxu0 0
    %488 = vmatprep.subr.bf16.mxu0 0
    %489 = vmatpush1.bf16.msra.mxu0 0
    %490 = vmatprep.subr.bf16.mxu0 0
    %491 = vmatpush1.bf16.msra.mxu0 0
    %492 = vmatprep.subr.bf16.mxu0 0
    %493 = vmatpush1.bf16.msra.mxu0 0
    %494 = vmatprep.subr.bf16.mxu0 0
    %495 = vmatpush1.bf16.msra.mxu0 0
    %496 = vmatprep.mubr.bf16.mxu0 0
    %497 = vmatmul.mubr.bf16.gmra.mrb[0].mxu0 %v222
    %v498 = vpop.f32.mrb[0].mxu0
    %v499 = vadd.f32 %v188, %v498
    %v500 = vpop.f32.mrb[0].mxu0
    %v501 = vadd.f32 %v192, %v500
    %v502 = vpop.f32.mrb[0].mxu0
    %v503 = vpop.f32.mrb[0].mxu0
    %504 = vdwg.mxu0
    %505 = vmatprep.subr.bf16.mxu0 %v371
    %506 = vmatpush1.bf16.msra.mxu0 %v370
    %507 = vmatprep.subr.bf16.mxu0 %v377
    %508 = vmatpush1.bf16.msra.mxu0 %v376
    %509 = vmatprep.subr.bf16.mxu0 %v383
    %510 = vmatpush1.bf16.msra.mxu0 %v382
    %511 = vmatprep.subr.bf16.mxu0 %v389
    %512 = vmatpush1.bf16.msra.mxu0 %v388
    %513 = vmatprep.subr.bf16.mxu0 %v395
    %514 = vmatpush1.bf16.msra.mxu0 %v394
    %515 = vmatprep.subr.bf16.mxu0 %v401
    %516 = vmatpush1.bf16.msra.mxu0 %v400
    %517 = vmatprep.subr.bf16.mxu0 %v407
    %518 = vmatpush1.bf16.msra.mxu0 %v406
    %519 = vmatprep.subr.bf16.mxu0 %v413
    %520 = vmatpush1.bf16.msra.mxu0 %v412
    %521 = vmatprep.subr.bf16.mxu0 0
    %522 = vmatpush1.bf16.msra.mxu0 0
    %523 = vmatprep.subr.bf16.mxu0 0
    %524 = vmatpush1.bf16.msra.mxu0 0
    %525 = vmatprep.subr.bf16.mxu0 0
    %526 = vmatpush1.bf16.msra.mxu0 0
    %527 = vmatprep.subr.bf16.mxu0 0
    %528 = vmatpush1.bf16.msra.mxu0 0
    %529 = vmatprep.subr.bf16.mxu0 0
    %530 = vmatpush1.bf16.msra.mxu0 0
    %531 = vmatprep.subr.bf16.mxu0 0
    %532 = vmatpush1.bf16.msra.mxu0 0
    %533 = vmatprep.subr.bf16.mxu0 0
    %534 = vmatpush1.bf16.msra.mxu0 0
    %535 = vmatprep.subr.bf16.mxu0 0
    %536 = vmatpush1.bf16.msra.mxu0 0
    %537 = vmatprep.mubr.bf16.mxu0 0
    %538 = vmatmul.mubr.bf16.gmra.mrb[0].mxu0 %v222
    %v539 = vpop.f32.mrb[0].mxu0
    %v540 = vadd.f32 %v196, %v539
    %v541 = vpop.f32.mrb[0].mxu0
    %v542 = vadd.f32 %v200, %v541
    %v543 = vpop.f32.mrb[0].mxu0
    %v544 = vpop.f32.mrb[0].mxu0
    %545 = vdwg.mxu0
    %546 = vmatprep.subr.bf16.mxu0 %v373
    %547 = vmatpush1.bf16.msra.mxu0 %v372
    %548 = vmatprep.subr.bf16.mxu0 %v379
    %549 = vmatpush1.bf16.msra.mxu0 %v378
    %550 = vmatprep.subr.bf16.mxu0 %v385
    %551 = vmatpush1.bf16.msra.mxu0 %v384
    %552 = vmatprep.subr.bf16.mxu0 %v391
    %553 = vmatpush1.bf16.msra.mxu0 %v390
    %554 = vmatprep.subr.bf16.mxu0 %v397
    %555 = vmatpush1.bf16.msra.mxu0 %v396
    %556 = vmatprep.subr.bf16.mxu0 %v403
    %557 = vmatpush1.bf16.msra.mxu0 %v402
    %558 = vmatprep.subr.bf16.mxu0 %v409
    %559 = vmatpush1.bf16.msra.mxu0 %v408
    %560 = vmatprep.subr.bf16.mxu0 %v415
    %561 = vmatpush1.bf16.msra.mxu0 %v414
    %562 = vmatprep.subr.bf16.mxu0 0
    %563 = vmatpush1.bf16.msra.mxu0 0
    %564 = vmatprep.subr.bf16.mxu0 0
    %565 = vmatpush1.bf16.msra.mxu0 0
    %566 = vmatprep.subr.bf16.mxu0 0
    %567 = vmatpush1.bf16.msra.mxu0 0
    %568 = vmatprep.subr.bf16.mxu0 0
    %569 = vmatpush1.bf16.msra.mxu0 0
    %570 = vmatprep.subr.bf16.mxu0 0
    %571 = vmatpush1.bf16.msra.mxu0 0
    %572 = vmatprep.subr.bf16.mxu0 0
    %573 = vmatpush1.bf16.msra.mxu0 0
    %574 = vmatprep.subr.bf16.mxu0 0
    %575 = vmatpush1.bf16.msra.mxu0 0
    %576 = vmatprep.subr.bf16.mxu0 0
    %577 = vmatpush1.bf16.msra.mxu0 0
    %578 = vmatprep.mubr.bf16.mxu0 0
    %579 = vmatmul.mubr.bf16.gmra.mrb[0].mxu0 %v222
    %v580 = vpop.f32.mrb[0].mxu0
    %v581 = vadd.f32 %v204, %v580
    %v582 = vpop.f32.mrb[0].mxu0
    %v583 = vadd.f32 %v208, %v582
    %v584 = vpop.f32.mrb[0].mxu0
    %v585 = vpop.f32.mrb[0].mxu0
    %586 = vdwg.mxu0
    %v587 = vtanh.pop %v499
    %v588 = vtanh.pop %v501
    %v589 = vtanh.pop %v540
    %v590 = vtanh.pop %v542
    %v591 = vtanh.pop %v581
    %v592 = vtanh.pop %v583
    %v593 = vld [vmem:[#allocation3] sm:$0x3]
    %v594 = vld [vmem:[#allocation5] sm:$0x3]
    %v595 = vlaneseq
    %v596 = vshrl.u32 %v595, 7
    %v597 = vsub.s32 0, %v596
    %v598 = vrot.slane %v593, %v597
    %600 = vbcast.lane.b32.xlu0 %v598, 256
    %v601 = vpop.permute.xlu0 %600
    %v602 = vlaneseq
    %v603 = vshrl.u32 %v602, 7
    %v604 = vsub.s32 1, %v603
    %v605 = vrot.slane %v593, %v604
    %607 = vbcast.lane.b32.xlu0 %v605, 256
    %v608 = vpop.permute.xlu0 %607
    %vm609 = vcmp.eq.s32.totalorder %v121, %v601
    %vm610 = vcmp.eq.s32.totalorder %v121, %v608
    %v611 = vsel %vm609, 1, 0
    %v612 = vsel %vm610, 1, 0
    %v613 = vcvt.s32.f32 %v611
    %v614 = vcvt.s32.f32 %v612
    %v615 = vlaneseq
    %v616 = vshrl.u32 %v615, 7
    %v617 = vsub.s32 0, %v616
    %v618 = vrot.slane %v594, %v617
    %620 = vbcast.lane.b32.xlu0 %v618, 256
    %v621 = vpop.permute.xlu0 %620
    %v622 = vlaneseq
    %v623 = vshrl.u32 %v622, 7
    %v624 = vsub.s32 1, %v623
    %v625 = vrot.slane %v594, %v624
    %627 = vbcast.lane.b32.xlu0 %v625, 256
    %v628 = vpop.permute.xlu0 %627
    %v629 = vmul.f32 %v613, %v621
    %v630 = vmul.f32 %v614, %v628
    %v631 = vrot.slane %v629, 4
    %v632 = vadd.f32 %v629, %v631
    %v633 = vrot.slane %v632, 2
    %v634 = vadd.f32 %v632, %v633
    %v635 = vrot.slane %v634, 1
    %v636 = vadd.f32 %v634, %v635
    %v637 = vrot.slane %v630, 4
    %v638 = vadd.f32 %v630, %v637
    %v639 = vrot.slane %v638, 2
    %v640 = vadd.f32 %v638, %v639
    %v641 = vrot.slane %v640, 1
    %v642 = vadd.f32 %v640, %v641
    %v643 = vsel %vm170, %v594, 0.0
    %644 = vadd.xlane.f32.xlu0 %v643
    %v645 = vpop.xlane.xlu0 %644
    %v646 = vmax.f32 %v645, 1.0
    %v647 = vrcp.pop %v646
    %v649 = vrot.slane %v647, 1
    %v652 = vmul.f32 %v636, %v647
    %v653 = vmul.f32 %v642, %v649
    %v654 = vpack.c.bf16 %v652, %v652
    %v655 = vpack.c.bf16 %v653, %v653
    %v658 = vunpack.c.l.b16 %v654
    %v659 = vunpack.c.l.b16 %v655
    %v660 = vrot.slane %v659, 7
    %v661 = vsel %vm220, %v660, %v658
    %v662 = vpack.c.b16 %v661, %v661
    %664 = vmatprep.subr.bf16.mxu0 %v369
    %665 = vmatpush1.bf16.msra.mxu0 %v368
    %666 = vmatprep.subr.bf16.mxu0 %v375
    %667 = vmatpush1.bf16.msra.mxu0 %v374
    %668 = vmatprep.subr.bf16.mxu0 %v381
    %669 = vmatpush1.bf16.msra.mxu0 %v380
    %670 = vmatprep.subr.bf16.mxu0 %v387
    %671 = vmatpush1.bf16.msra.mxu0 %v386
    %672 = vmatprep.subr.bf16.mxu0 %v393
    %673 = vmatpush1.bf16.msra.mxu0 %v392
    %674 = vmatprep.subr.bf16.mxu0 %v399
    %675 = vmatpush1.bf16.msra.mxu0 %v398
    %676 = vmatprep.subr.bf16.mxu0 %v405
    %677 = vmatpush1.bf16.msra.mxu0 %v404
    %678 = vmatprep.subr.bf16.mxu0 %v411
    %679 = vmatpush1.bf16.msra.mxu0 %v410
    %680 = vmatprep.subr.bf16.mxu0 0
    %681 = vmatpush1.bf16.msra.mxu0 0
    %682 = vmatprep.subr.bf16.mxu0 0
    %683 = vmatpush1.bf16.msra.mxu0 0
    %684 = vmatprep.subr.bf16.mxu0 0
    %685 = vmatpush1.bf16.msra.mxu0 0
    %686 = vmatprep.subr.bf16.mxu0 0
    %687 = vmatpush1.bf16.msra.mxu0 0
    %688 = vmatprep.subr.bf16.mxu0 0
    %689 = vmatpush1.bf16.msra.mxu0 0
    %690 = vmatprep.subr.bf16.mxu0 0
    %691 = vmatpush1.bf16.msra.mxu0 0
    %692 = vmatprep.subr.bf16.mxu0 0
    %693 = vmatpush1.bf16.msra.mxu0 0
    %694 = vmatprep.subr.bf16.mxu0 0
    %695 = vmatpush1.bf16.msra.mxu0 0
    %696 = vmatprep.mubr.bf16.mxu0 0
    %697 = vmatmul.mubr.bf16.gmra.mrb[0].mxu0 %v662
    %v698 = vpop.f32.mrb[0].mxu0
    %v699 = vadd.f32 %v188, %v698
    %v700 = vpop.f32.mrb[0].mxu0
    %v701 = vadd.f32 %v192, %v700
    %v702 = vpop.f32.mrb[0].mxu0
    %v703 = vpop.f32.mrb[0].mxu0
    %704 = vdwg.mxu0
    %705 = vmatprep.subr.bf16.mxu0 %v371
    %706 = vmatpush1.bf16.msra.mxu0 %v370
    %707 = vmatprep.subr.bf16.mxu0 %v377
    %708 = vmatpush1.bf16.msra.mxu0 %v376
    %709 = vmatprep.subr.bf16.mxu0 %v383
    %710 = vmatpush1.bf16.msra.mxu0 %v382
    %711 = vmatprep.subr.bf16.mxu0 %v389
    %712 = vmatpush1.bf16.msra.mxu0 %v388
    %713 = vmatprep.subr.bf16.mxu0 %v395
    %714 = vmatpush1.bf16.msra.mxu0 %v394
    %715 = vmatprep.subr.bf16.mxu0 %v401
    %716 = vmatpush1.bf16.msra.mxu0 %v400
    %717 = vmatprep.subr.bf16.mxu0 %v407
    %718 = vmatpush1.bf16.msra.mxu0 %v406
    %719 = vmatprep.subr.bf16.mxu0 %v413
    %720 = vmatpush1.bf16.msra.mxu0 %v412
    %721 = vmatprep.subr.bf16.mxu0 0
    %722 = vmatpush1.bf16.msra.mxu0 0
    %723 = vmatprep.subr.bf16.mxu0 0
    %724 = vmatpush1.bf16.msra.mxu0 0
    %725 = vmatprep.subr.bf16.mxu0 0
    %726 = vmatpush1.bf16.msra.mxu0 0
    %727 = vmatprep.subr.bf16.mxu0 0
    %728 = vmatpush1.bf16.msra.mxu0 0
    %729 = vmatprep.subr.bf16.mxu0 0
    %730 = vmatpush1.bf16.msra.mxu0 0
    %731 = vmatprep.subr.bf16.mxu0 0
    %732 = vmatpush1.bf16.msra.mxu0 0
    %733 = vmatprep.subr.bf16.mxu0 0
    %734 = vmatpush1.bf16.msra.mxu0 0
    %735 = vmatprep.subr.bf16.mxu0 0
    %736 = vmatpush1.bf16.msra.mxu0 0
    %737 = vmatprep.mubr.bf16.mxu0 0
    %738 = vmatmul.mubr.bf16.gmra.mrb[0].mxu0 %v662
    %v739 = vpop.f32.mrb[0].mxu0
    %v740 = vadd.f32 %v196, %v739
    %v741 = vpop.f32.mrb[0].mxu0
    %v742 = vadd.f32 %v200, %v741
    %v743 = vpop.f32.mrb[0].mxu0
    %v744 = vpop.f32.mrb[0].mxu0
    %745 = vdwg.mxu0
    %746 = vmatprep.subr.bf16.mxu0 %v373
    %747 = vmatpush1.bf16.msra.mxu0 %v372
    %748 = vmatprep.subr.bf16.mxu0 %v379
    %749 = vmatpush1.bf16.msra.mxu0 %v378
    %750 = vmatprep.subr.bf16.mxu0 %v385
    %751 = vmatpush1.bf16.msra.mxu0 %v384
    %752 = vmatprep.subr.bf16.mxu0 %v391
    %753 = vmatpush1.bf16.msra.mxu0 %v390
    %754 = vmatprep.subr.bf16.mxu0 %v397
    %755 = vmatpush1.bf16.msra.mxu0 %v396
    %756 = vmatprep.subr.bf16.mxu0 %v403
    %757 = vmatpush1.bf16.msra.mxu0 %v402
    %758 = vmatprep.subr.bf16.mxu0 %v409
    %759 = vmatpush1.bf16.msra.mxu0 %v408
    %760 = vmatprep.subr.bf16.mxu0 %v415
    %761 = vmatpush1.bf16.msra.mxu0 %v414
    %762 = vmatprep.subr.bf16.mxu0 0
    %763 = vmatpush1.bf16.msra.mxu0 0
    %764 = vmatprep.subr.bf16.mxu0 0
    %765 = vmatpush1.bf16.msra.mxu0 0
    %766 = vmatprep.subr.bf16.mxu0 0
    %767 = vmatpush1.bf16.msra.mxu0 0
    %768 = vmatprep.subr.bf16.mxu0 0
    %769 = vmatpush1.bf16.msra.mxu0 0
    %770 = vmatprep.subr.bf16.mxu0 0
    %771 = vmatpush1.bf16.msra.mxu0 0
    %772 = vmatprep.subr.bf16.mxu0 0
    %773 = vmatpush1.bf16.msra.mxu0 0
    %774 = vmatprep.subr.bf16.mxu0 0
    %775 = vmatpush1.bf16.msra.mxu0 0
    %776 = vmatprep.subr.bf16.mxu0 0
    %777 = vmatpush1.bf16.msra.mxu0 0
    %778 = vmatprep.mubr.bf16.mxu0 0
    %779 = vmatmul.mubr.bf16.gmra.mrb[0].mxu0 %v662
    %v780 = vpop.f32.mrb[0].mxu0
    %v781 = vadd.f32 %v204, %v780
    %v782 = vpop.f32.mrb[0].mxu0
    %v783 = vadd.f32 %v208, %v782
    %v784 = vpop.f32.mrb[0].mxu0
    %v785 = vpop.f32.mrb[0].mxu0
    %786 = vdwg.mxu0
    %v787 = vtanh.pop %v699
    %v788 = vtanh.pop %v701
    %v789 = vtanh.pop %v740
    %v790 = vtanh.pop %v742
    %v791 = vtanh.pop %v781
    %v792 = vtanh.pop %v783
    %v793 = vld [vmem:[%s6] ss:$2 sm:$0x3f]
    %s794 = scalar_lea.vmem %s6, 1
    %v795 = vld [vmem:[%s794] ss:$2 sm:$0x3f]
    %v797 = vlaneseq
    %v798 = vshrl.u32 %v797, 7
    %v799 = vsub.s32 0, %v798
    %v800 = vrot.slane %v793, %v799
    %v801 = vlaneseq
    %v802 = vshrl.u32 %v801, 7
    %v803 = vsub.s32 1, %v802
    %v804 = vrot.slane %v793, %v803
    %v805 = vlaneseq
    %v806 = vshrl.u32 %v805, 7
    %v807 = vsub.s32 2, %v806
    %v808 = vrot.slane %v793, %v807
    %v809 = vlaneseq
    %v810 = vshrl.u32 %v809, 7
    %v811 = vsub.s32 3, %v810
    %v812 = vrot.slane %v793, %v811
    %v813 = vlaneseq
    %v814 = vshrl.u32 %v813, 7
    %v815 = vsub.s32 4, %v814
    %v816 = vrot.slane %v793, %v815
    %v817 = vlaneseq
    %v818 = vshrl.u32 %v817, 7
    %v819 = vsub.s32 5, %v818
    %v820 = vrot.slane %v793, %v819
    %v827 = vmul.f32 %v587, %v800
    %v828 = vmul.f32 %v588, %v804
    %v829 = vmul.f32 %v589, %v808
    %v830 = vmul.f32 %v590, %v812
    %v831 = vmul.f32 %v591, %v816
    %v832 = vmul.f32 %v592, %v820
    %v834 = vlaneseq
    %v835 = vshrl.u32 %v834, 7
    %v836 = vsub.s32 0, %v835
    %v837 = vrot.slane %v795, %v836
    %v838 = vlaneseq
    %v839 = vshrl.u32 %v838, 7
    %v840 = vsub.s32 1, %v839
    %v841 = vrot.slane %v795, %v840
    %v842 = vlaneseq
    %v843 = vshrl.u32 %v842, 7
    %v844 = vsub.s32 2, %v843
    %v845 = vrot.slane %v795, %v844
    %v846 = vlaneseq
    %v847 = vshrl.u32 %v846, 7
    %v848 = vsub.s32 3, %v847
    %v849 = vrot.slane %v795, %v848
    %v850 = vlaneseq
    %v851 = vshrl.u32 %v850, 7
    %v852 = vsub.s32 4, %v851
    %v853 = vrot.slane %v795, %v852
    %v854 = vlaneseq
    %v855 = vshrl.u32 %v854, 7
    %v856 = vsub.s32 5, %v855
    %v857 = vrot.slane %v795, %v856
    %v864 = vmul.f32 %v787, %v837
    %v865 = vmul.f32 %v788, %v841
    %v866 = vmul.f32 %v789, %v845
    %v867 = vmul.f32 %v790, %v849
    %v868 = vmul.f32 %v791, %v853
    %v869 = vmul.f32 %v792, %v857
    %v870 = vadd.f32 %v827, %v864
    %v871 = vadd.f32 %v828, %v865
    %v872 = vadd.f32 %v829, %v866
    %v873 = vadd.f32 %v830, %v867
    %v874 = vadd.f32 %v831, %v868
    %v875 = vadd.f32 %v832, %v869
    %vm876 = vcmask 1041408
    %v877 = vsel %vm876, %v870, 0.0
    %v878 = vsel %vm876, %v871, 0.0
    %v879 = vadd.f32 %v877, %v878
    %v880 = vsel %vm876, %v872, 0.0
    %v881 = vadd.f32 %v879, %v880
    %v882 = vsel %vm876, %v873, 0.0
    %v883 = vadd.f32 %v881, %v882
    %v884 = vsel %vm876, %v874, 0.0
    %v885 = vadd.f32 %v883, %v884
    %v886 = vsel %vm876, %v875, 0.0
    %v887 = vadd.f32 %v885, %v886
    %888 = vadd.xlane.f32.xlu0 %v887
    %v889 = vpop.xlane.xlu0 %888
    %v890 = vld [vmem:[#allocation2] sm:$0x1]
    %v892 = vlaneseq
    %v893 = vshrl.u32 %v892, 7
    %v894 = vsub.s32 0, %v893
    %v895 = vrot.slane %v890, %v894
    %v897 = vadd.f32 %v889, %v895
    %v898 = vxor.u32 %v897, 2147483648
    %v899 = vmul.f32 %v898, 1.442695
    %v900 = vpow.pop %v899
    %v901 = vadd.f32 %v900, 1.0
    %v902 = vrcp.pop %v901
    %v903 = vmul.f32 1.0, %v902
    %vm904 = vcmask 1024
    %905 = vst.msk [vmem:[%s8] sm:$0x3] %vm904, %v903
    // Predicated region
    $region46: #{siamese_forward.1} parent=1 // pred_check
      _
    $region47: #{siamese_forward.1} parent=1 // pred_check_branch
      %907 = sbr.rel (0) target = $region49
    $region48: #{siamese_forward.1} parent=1 // pred_region
      _
    $region49: #{siamese_forward.1} parent=1 // pred_fallthru
      _
    // Predicated region
    $region50: #{siamese_forward.1} parent=1 // pred_check
      _
    $region51: #{siamese_forward.1} parent=1 // pred_check_branch
      %909 = sbr.rel (0) target = $region53
    $region52: #{siamese_forward.1} parent=1 // pred_region
      _
    $region53: #{siamese_forward.1} parent=1 // pred_fallthru
      _
    %910 = vsyncpa [#allocation4], 1
    %911 = vsyncpa [#allocation6], 1

</llo_original>
